<compile_context>
chip_gen: v6e
topology: v6e:2x2x1
jax: 0.10.0
libtpu: 0.0.40
codegen_flags: <defaults>
</compile_context>

<pallas_src>
import functools

import jax
import jax.numpy as jnp
from jax.experimental import pallas as pl
from jax.experimental.pallas import tpu as pltpu

EPS = 1e-5  # PyTorch nn.LayerNorm default


def _round_up(v, m):
    return ((v + m - 1) // m) * m


def _layernorm_rows(x_f32, *, inv_d, d_valid, d_padded):
    """Two-pass (PyTorch-exact) LayerNorm over the last axis.

    Padded lanes (>= d_valid) must be zero on input; they are forced back to
    zero after centering so they contribute nothing to the variance nor to the
    downstream matmul.
    """
    mean = jnp.sum(x_f32, axis=-1, keepdims=True) * inv_d
    xc = x_f32 - mean
    if d_valid != d_padded:  # trace-time branch: only when features are padded
        lane = jax.lax.broadcasted_iota(jnp.int32, xc.shape, xc.ndim - 1)
        xc = jnp.where(lane < d_valid, xc, 0.0)
    var = jnp.sum(xc * xc, axis=-1, keepdims=True) * inv_d
    return xc * jax.lax.rsqrt(var + EPS)


def _prenorm_kernel_fullwidth(x_ref, w_ref, b_ref, o_ref, *, inv_d, d_valid, d_padded):
    # Full-width W^T resident in VMEM: LN once per row tile, one big matmul.
    x = x_ref[...].astype(jnp.float32)
    normed = _layernorm_rows(x, inv_d=inv_d, d_valid=d_valid, d_padded=d_padded)
    y = jnp.dot(normed.astype(w_ref.dtype), w_ref[...],
                preferred_element_type=jnp.float32)
    o_ref[...] = (y + b_ref[...].astype(jnp.float32)).astype(o_ref.dtype)


def _prenorm_kernel_coltiled(x_ref, w_ref, b_ref, o_ref, normed_ref, *,
                             inv_d, d_valid, d_padded):
    # W^T column-tiled: compute LayerNorm only at j == 0 and cache the
    # matmul-dtype rows in VMEM scratch; every column step is then a pure
    # MXU matmul against its W^T block (no redundant VPU/XLU/EUP work).
    @pl.when(pl.program_id(1) == 0)
    def _():
        x = x_ref[...].astype(jnp.float32)
        normed = _layernorm_rows(x, inv_d=inv_d, d_valid=d_valid, d_padded=d_padded)
        normed_ref[...] = normed.astype(normed_ref.dtype)

    y = jnp.dot(normed_ref[...], w_ref[...], preferred_element_type=jnp.float32)
    o_ref[...] = (y + b_ref[...].astype(jnp.float32)).astype(o_ref.dtype)


def fold_prenorm_linear_params(gamma, beta, w_t, b, *, weight_dtype=None):
    """One-time (init) parameter prep: fold the LayerNorm affine into the Linear.

        LN(x) @ W^T + b == xhat @ (gamma[:, None] * W^T) + (beta @ W^T + b)

    Folding is done in f32 with a single cast at the end, and the feature dim
    is zero-padded to a multiple of 128 here, so no per-call parameter work or
    extra HBM passes happen inside the forward wrapper.
    Returns (w_fold_t [D_pad, D_pad], b_fused [1, D_pad] f32).
    """
    D = w_t.shape[0]
    assert w_t.shape == (D, D)
    w32 = w_t.astype(jnp.float32)
    w_fold = gamma.astype(jnp.float32)[:, None] * w32              # gamma -> W rows
    b_fused = beta.astype(jnp.float32) @ w32 + b.astype(jnp.float32)  # beta -> bias

    d_pad = _round_up(D, 128)
    if d_pad != D:
        w_fold = jnp.pad(w_fold, ((0, d_pad - D), (0, d_pad - D)))
        b_fused = jnp.pad(b_fused, (0, d_pad - D))
    if weight_dtype is not None:
        w_fold = w_fold.astype(weight_dtype)   # e.g. bf16 -> bf16 MXU path
    return w_fold, b_fused.reshape(1, d_pad)


def prenorm_linear(x, w_fold_t, b_fused, *, tile_rows=512, tile_cols=None,
                   vmem_limit_bytes=None):
    """Fused PreNorm(LayerNorm -> Linear) forward.

    x: (..., D).  w_fold_t: (D_pad, D_pad) gamma-folded W^T.  b_fused: (1, D_pad).
    (Both from fold_prenorm_linear_params, computed once at init.)
    """
    *lead, D = x.shape
    d_pad = w_fold_t.shape[0]
    assert w_fold_t.shape == (d_pad, d_pad) and d_pad % 128 == 0 and D <= d_pad
    assert b_fused.shape == (1, d_pad)

    M = 1
    for s in lead:
        M *= int(s)
    out_dtype = x.dtype

    # Collapse leading dims (free); pad features only when D isn't lane-aligned.
    # Ragged rows are left to Pallas edge blocks (no M padding / output slicing).
    x2 = x.reshape(M, D)
    if d_pad != D:
        x2 = jnp.pad(x2, ((0, 0), (0, d_pad - D)))

    xb = x2.dtype.itemsize
    wb = w_fold_t.dtype.itemsize
    bb = b_fused.dtype.itemsize
    ob = jnp.dtype(out_dtype).itemsize

    # Row tile: large (feeds the MXU, amortizes ~0.35us/grid-step), rounded to
    # the sublane packing of the activation dtype.
    row_align = 16 if x2.dtype == jnp.bfloat16 else 8
    tm = _round_up(min(int(tile_rows), _round_up(M, row_align)), row_align)

    # Per-TensorCore VMEM budget (v7x only has 64 MiB; leave headroom).
    try:
        vmem_cap = int(pltpu.get_tpu_info().vmem_capacity_bytes)
    except Exception:
        vmem_cap = 64 * 1024 * 1024   # conservative (v7x) fallback
    budget = int(vmem_cap * 0.75)

    def vmem_est(tm_, tn_, w_bufs):
        grid_j_ = d_pad // tn_
        scratch = 0 if grid_j_ == 1 else tm_ * d_pad * wb      # cached `normed`
        return (2 * tm_ * d_pad * xb                            # x (double-buffered)
                + w_bufs * (d_pad * tn_ * wb + tn_ * bb)        # W^T + fused bias
                + 2 * tm_ * tn_ * ob                            # output
                + scratch)

    # Column tiling of W^T: prefer full width (W streamed once, LN never redone);
    # fall back to a single-buffered resident W, then to column tiles that are
    # multiples of 256 (v6e/v7x MXU is 256 wide; v5e is fine with anything >=128).
    single_buffer_w = False
    if tile_cols is None:
        tn = d_pad
        if vmem_est(tm, tn, 2) > budget:
            if vmem_est(tm, tn, 1) <= budget:
                single_buffer_w = True
            else:
                while (vmem_est(tm, tn, 2) > budget and tn > 256
                       and tn % 256 == 0 and d_pad % (tn // 2) == 0):
                    tn //= 2
    else:
        tn = int(tile_cols)
        assert tn % 128 == 0 and d_pad % tn == 0, "tile_cols must divide D_pad, %128==0"
    grid_j = d_pad // tn
    if grid_j > 1:
        single_buffer_w = False            # W block index varies -> keep pipelining
    w_bufs = 1 if single_buffer_w else 2
    while vmem_est(tm, tn, w_bufs) > budget and tm > row_align:
        tm = _round_up(max(tm // 2, row_align), row_align)

    grid_i = pl.cdiv(M, tm)

    if vmem_limit_bytes is None:
        est = vmem_est(tm, tn, w_bufs)
        vmem_limit_bytes = int(min(vmem_cap * 0.9,
                                   max(int(est * 1.4) + (1 << 20), 32 * 1024 * 1024)))

    # W^T is re-streamed once per row tile when column-tiled (x is streamed once
    # either way — which is why tm is maximized before it is ever shrunk).
    w_streams = grid_i if grid_j > 1 else 1
    cost = pl.CostEstimate(
        flops=int(2 * M * d_pad * d_pad + 5 * M * d_pad),
        transcendentals=int(M),                                   # one rsqrt per row
        bytes_accessed=int(x2.size * xb + w_fold_t.size * wb * w_streams
                           + b_fused.size * bb + M * d_pad * ob),
    )

    # Single-buffer the resident operands only when that is required to fit the
    # VMEM budget (their block index is constant, so the 2nd buffer is dead).
    w_kwargs = dict(pipeline_mode=pl.Buffered(1)) if single_buffer_w else {}

    in_specs = [
        pl.BlockSpec((tm, d_pad), lambda i, j: (i, 0)),              # x rows (full D)
        pl.BlockSpec((d_pad, tn), lambda i, j: (0, j), **w_kwargs),  # W^T column block
        pl.BlockSpec((1, tn), lambda i, j: (0, j), **w_kwargs),      # fused bias block
    ]
    out_specs = pl.BlockSpec((tm, tn), lambda i, j: (i, j))

    static = dict(inv_d=float(1.0 / D), d_valid=int(D), d_padded=int(d_pad))
    if grid_j == 1:
        kernel = functools.partial(_prenorm_kernel_fullwidth, **static)
        scratch_shapes = ()
    else:
        kernel = functools.partial(_prenorm_kernel_coltiled, **static)
        scratch_shapes = [pltpu.VMEM((tm, d_pad), w_fold_t.dtype)]

    out2 = pl.pallas_call(
        kernel,
        out_shape=jax.ShapeDtypeStruct((M, d_pad), out_dtype),
        grid_spec=pltpu.PrefetchScalarGridSpec(
            num_scalar_prefetch=0,
            grid=(grid_i, grid_j),
            in_specs=in_specs,
            out_specs=out_specs,
            scratch_shapes=scratch_shapes,
        ),
        compiler_params=pltpu.CompilerParams(
            # Row tiles are independent -> megacore-shard them; the column axis
            # must stay sequential so the cached `normed` rows are reused.
            dimension_semantics=("parallel", "arbitrary"),
            vmem_limit_bytes=vmem_limit_bytes,
        ),
        cost_estimate=cost,
    )(x2, w_fold_t, b_fused)

    if d_pad != D:
        out2 = out2[:, :D]
    return out2.reshape(*lead, D)


def prenorm_reference(x, gamma, beta, w_t, b):
    xf = x.astype(jnp.float32)
    mean = jnp.mean(xf, axis=-1, keepdims=True)
    var = jnp.mean((xf - mean) ** 2, axis=-1, keepdims=True)
    xhat = (xf - mean) * jax.lax.rsqrt(var + EPS)
    normed = xhat * gamma.astype(jnp.float32) + beta.astype(jnp.float32)
    y = normed @ w_t.astype(jnp.float32) + b.astype(jnp.float32)
    return y.astype(x.dtype)


if __name__ == "__main__":
    root = jax.random.PRNGKey(0)
    k1, k2 = jax.random.split(root)

    # ---- Test 1: f32 params, awkward feature dim (D % 128 != 0 -> padded lanes) ----
    B, N, D = 2, 8, 32
    kx, kg, kb, kw, kbias = jax.random.split(k1, 5)
    x = jax.random.normal(kx, (B, N, D), dtype=jnp.float32)
    gamma = jnp.ones((D,), jnp.float32) + 0.01 * jax.random.normal(kg, (D,))
    beta = 0.01 * jax.random.normal(kb, (D,))
    w_t = jax.random.normal(kw, (D, D), dtype=jnp.float32) / jnp.sqrt(D)   # W^T
    b = 0.01 * jax.random.normal(kbias, (D,))

    w_fold, b_fused = fold_prenorm_linear_params(gamma, beta, w_t, b)
    out = jax.block_until_ready(prenorm_linear(x, w_fold, b_fused))
    ref = prenorm_reference(x, gamma, beta, w_t, b)
    assert out.shape == (B, N, D)
    assert jnp.allclose(out, ref, atol=1e-4, rtol=1e-4), "f32 path mismatch vs reference"

    # ---- Test 2: lane-aligned D (no activation padding), bf16 weights, ragged rows ----
    B2, N2, D2 = 2, 7, 128
    kx2, kg2, kb2, kw2, kbias2 = jax.random.split(k2, 5)
    xb2 = jax.random.normal(kx2, (B2, N2, D2), dtype=jnp.float32)
    gamma2 = jnp.ones((D2,), jnp.float32) + 0.01 * jax.random.normal(kg2, (D2,))
    beta2 = 0.01 * jax.random.normal(kb2, (D2,))
    w_t2 = jax.random.normal(kw2, (D2, D2), dtype=jnp.float32) / jnp.sqrt(D2)
    b2 = 0.01 * jax.random.normal(kbias2, (D2,))

    w_fold2, b_fused2 = fold_prenorm_linear_params(gamma2, beta2, w_t2, b2,
                                                   weight_dtype=jnp.bfloat16)
    out_b = jax.block_until_ready(prenorm_linear(xb2, w_fold2, b_fused2))
    ref_b = prenorm_reference(xb2, gamma2, beta2, w_t2, b2)
    assert out_b.shape == (B2, N2, D2)
    assert jnp.allclose(out_b, ref_b, atol=5e-2, rtol=5e-2), "bf16 path mismatch vs reference"

    print("KERNEL_OK")
</pallas_src>

<mosaic_0001>
module attributes {stable_mosaic.version = 11 : i64} {
  func.func @_prenorm_kernel_fullwidth(%arg0: i32, %arg1: i32, %arg2: memref<16x128xf32, #tpu.memory_space<vmem>>, %arg3: memref<128x128xf32, #tpu.memory_space<vmem>>, %arg4: memref<1x128xf32, #tpu.memory_space<vmem>>, %arg5: memref<16x128xf32, #tpu.memory_space<vmem>>) attributes {dimension_semantics = [#tpu.dimension_semantics<parallel>, #tpu.dimension_semantics<arbitrary>], iteration_bounds = array<i64: 1, 1>, scalar_prefetch = 0 : i64, scratch_operands = 0 : i64, tpu.core_type = #tpu.core_type<tc>, window_params = [{transform_indices = @transform_0, window_bounds = array<i64: 16, 128>}, {transform_indices = @transform_1, window_bounds = array<i64: 128, 128>}, {transform_indices = @transform_2, window_bounds = array<i64: 1, 128>}, {transform_indices = @transform_3, window_bounds = array<i64: 16, 128>}]} {
    %c0 = arith.constant 0 : index
    %c0_0 = arith.constant 0 : index
    %0 = vector.load %arg2[%c0, %c0_0] : memref<16x128xf32, #tpu.memory_space<vmem>>, vector<16x128xf32>
    %cst = arith.constant dense<0.000000e+00> : vector<16xf32>
    %1 = vector.multi_reduction <add>, %0, %cst [1] : vector<16x128xf32> to vector<16xf32>
    %2 = vector.shape_cast %1 : vector<16xf32> to vector<16x1xf32>
    %cst_1 = arith.constant 3.125000e-02 : f32
    %3 = vector.broadcast %cst_1 : f32 to vector<16x1xf32>
    %4 = arith.mulf %2, %3 : vector<16x1xf32>
    %5 = vector.broadcast %4 : vector<16x1xf32> to vector<16x128xf32>
    %6 = arith.subf %0, %5 : vector<16x128xf32>
    %7 = tpu.iota {dimensions = array<i32: 1>} : vector<16x128xi32>
    %c32_i32 = arith.constant 32 : i32
    %8 = vector.broadcast %c32_i32 : i32 to vector<16x128xi32>
    %9 = arith.cmpi slt, %7, %8 : vector<16x128xi32>
    %cst_2 = arith.constant 0.000000e+00 : f32
    %10 = vector.broadcast %cst_2 : f32 to vector<16x128xf32>
    %11 = arith.select %9, %6, %10 : vector<16x128xi1>, vector<16x128xf32>
    %12 = arith.mulf %11, %11 : vector<16x128xf32>
    %cst_3 = arith.constant dense<0.000000e+00> : vector<16xf32>
    %13 = vector.multi_reduction <add>, %12, %cst_3 [1] : vector<16x128xf32> to vector<16xf32>
    %14 = vector.shape_cast %13 : vector<16xf32> to vector<16x1xf32>
    %cst_4 = arith.constant 3.125000e-02 : f32
    %15 = vector.broadcast %cst_4 : f32 to vector<16x1xf32>
    %16 = arith.mulf %14, %15 : vector<16x1xf32>
    %cst_5 = arith.constant 9.99999974E-6 : f32
    %17 = vector.broadcast %cst_5 : f32 to vector<16x1xf32>
    %18 = arith.addf %16, %17 : vector<16x1xf32>
    %19 = math.rsqrt %18 : vector<16x1xf32>
    %20 = vector.broadcast %19 : vector<16x1xf32> to vector<16x128xf32>
    %21 = arith.mulf %11, %20 : vector<16x128xf32>
    %c0_6 = arith.constant 0 : index
    %c0_7 = arith.constant 0 : index
    %22 = vector.load %arg3[%c0_6, %c0_7] : memref<128x128xf32, #tpu.memory_space<vmem>>, vector<128x128xf32>
    %cst_8 = arith.constant dense<0.000000e+00> : vector<16x128xf32>
    %23 = tpu.matmul %21, %22, %cst_8 {dimension_numbers = #tpu.dot_dimension_numbers<[1], [0], [0], [1], [0, 0, 1, 1], [], []>} : vector<16x128xf32>, vector<128x128xf32>, vector<16x128xf32> -> vector<16x128xf32>
    %c0_9 = arith.constant 0 : index
    %c0_10 = arith.constant 0 : index
    %24 = vector.load %arg4[%c0_9, %c0_10] : memref<1x128xf32, #tpu.memory_space<vmem>>, vector<1x128xf32>
    %25 = vector.broadcast %24 : vector<1x128xf32> to vector<16x128xf32>
    %26 = arith.addf %23, %25 : vector<16x128xf32>
    %c0_11 = arith.constant 0 : index
    %c0_12 = arith.constant 0 : index
    %27 = vector.load %arg5[%c0_11, %c0_12] : memref<16x128xf32, #tpu.memory_space<vmem>>, vector<16x128xf32>
    tpu.vector_store %arg5[%c0_11, %c0_12], %26 {strides = array<i32>} : memref<16x128xf32, #tpu.memory_space<vmem>>, vector<16x128xf32>,
    return
  }
  func.func @transform_0(%arg0: i32, %arg1: i32) -> (i32, i32) {
    %c0_i32 = arith.constant 0 : i32
    %c0_i32_0 = arith.constant 0 : i32
    return %arg0, %c0_i32 : i32, i32
  }
  func.func @transform_1(%arg0: i32, %arg1: i32) -> (i32, i32) {
    %c0_i32 = arith.constant 0 : i32
    %c0_i32_0 = arith.constant 0 : i32
    return %c0_i32, %arg1 : i32, i32
  }
  func.func @transform_2(%arg0: i32, %arg1: i32) -> (i32, i32) {
    %c0_i32 = arith.constant 0 : i32
    %c0_i32_0 = arith.constant 0 : i32
    return %c0_i32, %arg1 : i32, i32
  }
  func.func @transform_3(%arg0: i32, %arg1: i32) -> (i32, i32) {
    %c0_i32 = arith.constant 0 : i32
    return %arg0, %arg1 : i32, i32
  }
}

</mosaic_0001>

<llo_original>
// kernel: tpu_custom_call.1
$region0: #{tpu_custom_call.1}
  #allocation0 [shape = 'u32[]', space=smem, size = 0x4, offset = 0x4, fixed_abs, tag = 'smem constant byte address 0x4 - core index']
  #allocation1 [shape = 'u32[144,128]{1,0:T(1,128)}', space=vmem, size = 0x12000, scoped, tag = 'internal scratch']
  %s0 = inlined_call_operand.hbm [shape: f32[16,128], index: 0, kind: input, shape index: {}]
  %s1 = inlined_call_operand.hbm [shape: f32[128,128], index: 1, kind: input, shape index: {}]
  %s2 = inlined_call_operand.vmem [shape: f32[1,128], index: 2, kind: input, shape index: {}]
  %s3 = inlined_call_operand.hbm [shape: f32[16,128], index: 3, kind: output, shape index: {}]
  %s4 = sld [smem:[#allocation0]]
  $region30: #{tpu_custom_call.1} parent=0
    _
  %s6 = ssub.s32 1, %s4
  %s7 = scalar_select 0, %s6, %s4
  $region1: #{tpu_custom_call.1} parent=0
    #allocation2 [shape = 'u8[8192]{0}', space=vmem, size = 0x2000, scoped, tag = 'input window, operand 0, single buffered']
    #allocation3 [shape = 's32[1]{0}', space=sflag, size = 0x4, scoped, tag = 'scoped memory for tpu_custom_call.1']
    #allocation4 [shape = 's32[1]{0}', space=sflag, size = 0x4, scoped, tag = 'scoped memory for tpu_custom_call.1']
    #allocation5 [shape = 'u8[65536]{0}', space=vmem, size = 0x10000, scoped, tag = 'input window, operand 1, single buffered']
    #allocation6 [shape = 's32[1]{0}', space=sflag, size = 0x4, scoped, tag = 'scoped memory for tpu_custom_call.1']
    #allocation7 [shape = 'u8[8192]{0}', space=vmem, size = 0x2000, scoped, tag = 'output window, operand 0, single buffered']
    %8 = vsyncpa [#allocation3], 0
    %9 = vsyncpa [#allocation6], 0
    %10 = vsyncpa [#allocation4], 0
    // Predicated region
    $region2: #{tpu_custom_call.1} parent=1 // pred_check
      _
    $region3: #{tpu_custom_call.1} parent=1 // pred_check_branch
      %12 = sbr.rel (0) target = $region5
    $region4: #{tpu_custom_call.1} parent=1 // pred_region
      %s14 = ssub.s32 256, 256
      %15 = vsyncadd [#allocation3], %s14
      %s16 = sshll.u32 [#allocation2], 4
      %s17 = int_to_ptr.vmem [resolvable:$true] %s16
      %22 = dma.hbm_to_vmem [thread:$0]  %s0, 256, %s17, [#allocation3], 128, 128, 8
    $region5: #{tpu_custom_call.1} parent=1 // pred_fallthru
      _
    // Predicated region
    $region6: #{tpu_custom_call.1} parent=1 // pred_check
      _
    $region7: #{tpu_custom_call.1} parent=1 // pred_check_branch
      %24 = sbr.rel (0) target = $region9
    $region8: #{tpu_custom_call.1} parent=1 // pred_region
      %s26 = ssub.s32 2048, 2048
      %27 = vsyncadd [#allocation6], %s26
      %s28 = sshll.u32 [#allocation5], 4
      %s29 = int_to_ptr.vmem [resolvable:$true] %s28
      %34 = dma.hbm_to_vmem [thread:$0]  %s1, 2048, %s29, [#allocation6], 128, 128, 8
    $region9: #{tpu_custom_call.1} parent=1 // pred_fallthru
      _
    // Predicated region
    $region10: #{tpu_custom_call.1} parent=1 // pred_check
      _
    $region11: #{tpu_custom_call.1} parent=1 // pred_check_branch
      %36 = sbr.rel (0) target = $region13
    $region12: #{tpu_custom_call.1} parent=1 // pred_region
      _
    $region13: #{tpu_custom_call.1} parent=1 // pred_fallthru
      _
    // Predicated region
    $region14: #{tpu_custom_call.1} parent=1 // pred_check
      _
    $region15: #{tpu_custom_call.1} parent=1 // pred_check_branch
      %38 = sbr.rel (0) target = $region17
    $region16: #{tpu_custom_call.1} parent=1 // pred_region
      %39 = dma.done [#allocation3], 256
    $region17: #{tpu_custom_call.1} parent=1 // pred_fallthru
      _
    // Predicated region
    $region18: #{tpu_custom_call.1} parent=1 // pred_check
      _
    $region19: #{tpu_custom_call.1} parent=1 // pred_check_branch
      %41 = sbr.rel (0) target = $region21
    $region20: #{tpu_custom_call.1} parent=1 // pred_region
      %42 = dma.done [#allocation6], 2048
    $region21: #{tpu_custom_call.1} parent=1 // pred_fallthru
      _
    %v43 = vld [vmem:[#allocation2] sm:$0xff]
    %v44 = vld [vmem:[#allocation2 + $0x8] sm:$0xff]
    %45 = vadd.xlane.f32.xlu0 %v43
    %v46 = vpop.xlane.xlu0 %45
    %47 = vadd.xlane.f32.xlu0 %v44
    %v48 = vpop.xlane.xlu0 %47
    %v49 = vmul.f32 %v46, 0.03125
    %v50 = vmul.f32 %v48, 0.03125
    %v51 = vsub.f32 %v43, %v49
    %v52 = vsub.f32 %v44, %v50
    %v53 = vlaneseq
    %v54 = vand.u32 %v53, 127
    %vm55 = vcmp.lt.s32.totalorder %v54, 32
    %v56 = vsel %vm55, %v51, 0.0
    %v57 = vsel %vm55, %v52, 0.0
    %v58 = vmul.f32 %v56, %v56
    %v59 = vmul.f32 %v57, %v57
    %60 = vadd.xlane.f32.xlu0 %v58
    %v61 = vpop.xlane.xlu0 %60
    %62 = vadd.xlane.f32.xlu0 %v59
    %v63 = vpop.xlane.xlu0 %62
    %v64 = vmul.f32 %v61, 0.03125
    %v65 = vmul.f32 %v63, 0.03125
    %v66 = vadd.f32 %v64, 1e-05
    %v67 = vadd.f32 %v65, 1e-05
    %v68 = vrsqrt.pop %v66
    %v69 = vrsqrt.pop %v67
    %v70 = vmul.f32 %v56, %v68
    %v71 = vmul.f32 %v57, %v69
    %v72 = vld [vmem:[#allocation5] sm:$0xff]
    %v73 = vld [vmem:[#allocation5 + $0x8] sm:$0xff]
    %v74 = vld [vmem:[#allocation5 + $0x10] sm:$0xff]
    %v75 = vld [vmem:[#allocation5 + $0x18] sm:$0xff]
    %v76 = vld [vmem:[#allocation5 + $0x20] sm:$0xff]
    %v77 = vld [vmem:[#allocation5 + $0x28] sm:$0xff]
    %v78 = vld [vmem:[#allocation5 + $0x30] sm:$0xff]
    %v79 = vld [vmem:[#allocation5 + $0x38] sm:$0xff]
    %v80 = vld [vmem:[#allocation5 + $0x40] sm:$0xff]
    %v81 = vld [vmem:[#allocation5 + $0x48] sm:$0xff]
    %v82 = vld [vmem:[#allocation5 + $0x50] sm:$0xff]
    %v83 = vld [vmem:[#allocation5 + $0x58] sm:$0xff]
    %v84 = vld [vmem:[#allocation5 + $0x60] sm:$0xff]
    %v85 = vld [vmem:[#allocation5 + $0x68] sm:$0xff]
    %v86 = vld [vmem:[#allocation5 + $0x70] sm:$0xff]
    %v87 = vld [vmem:[#allocation5 + $0x78] sm:$0xff]
    %v88 = vld [vmem:[%s2] sm:$0x1]
    %v90 = vlaneseq
    %v91 = vshrl.u32 %v90, 7
    %v92 = vsub.s32 0, %v91
    %v93 = vrot.slane %v88, %v92
    %95 = vmatprep.subr.mxu0 0.0
    %96 = vmatpush1.msra.mxu0 %v87
    %97 = vmatprep.subr.mxu0 0.0
    %98 = vmatpush1.msra.mxu0 %v86
    %99 = vmatprep.subr.mxu0 0.0
    %100 = vmatpush1.msra.mxu0 %v85
    %101 = vmatprep.subr.mxu0 0.0
    %102 = vmatpush1.msra.mxu0 %v84
    %103 = vmatprep.subr.mxu0 0.0
    %104 = vmatpush1.msra.mxu0 %v83
    %105 = vmatprep.subr.mxu0 0.0
    %106 = vmatpush1.msra.mxu0 %v82
    %107 = vmatprep.subr.mxu0 0.0
    %108 = vmatpush1.msra.mxu0 %v81
    %109 = vmatprep.subr.mxu0 0.0
    %110 = vmatpush1.msra.mxu0 %v80
    %111 = vmatprep.subr.mxu0 0.0
    %112 = vmatpush1.msra.mxu0 %v79
    %113 = vmatprep.subr.mxu0 0.0
    %114 = vmatpush1.msra.mxu0 %v78
    %115 = vmatprep.subr.mxu0 0.0
    %116 = vmatpush1.msra.mxu0 %v77
    %117 = vmatprep.subr.mxu0 0.0
    %118 = vmatpush1.msra.mxu0 %v76
    %119 = vmatprep.subr.mxu0 0.0
    %120 = vmatpush1.msra.mxu0 %v75
    %121 = vmatprep.subr.mxu0 0.0
    %122 = vmatpush1.msra.mxu0 %v74
    %123 = vmatprep.subr.mxu0 0.0
    %124 = vmatpush1.msra.mxu0 %v73
    %125 = vmatprep.subr.mxu0 0.0
    %126 = vmatpush1.msra.mxu0 %v72
    %127 = vmatprep.subr.mxu0 0.0
    %128 = vmatpush2.msra.mxu0 0.0
    %129 = vmatprep.subr.mxu0 0.0
    %130 = vmatpush2.msra.mxu0 0.0
    %131 = vmatprep.subr.mxu0 0.0
    %132 = vmatpush2.msra.mxu0 0.0
    %133 = vmatprep.subr.mxu0 0.0
    %134 = vmatpush2.msra.mxu0 0.0
    %135 = vmatprep.subr.mxu0 0.0
    %136 = vmatpush2.msra.mxu0 0.0
    %137 = vmatprep.subr.mxu0 0.0
    %138 = vmatpush2.msra.mxu0 0.0
    %139 = vmatprep.subr.mxu0 0.0
    %140 = vmatpush2.msra.mxu0 0.0
    %141 = vmatprep.subr.mxu0 0.0
    %142 = vmatpush2.msra.mxu0 0.0
    %143 = vmatprep.subr.mxu0 0.0
    %144 = vmatpush2.msra.mxu0 0.0
    %145 = vmatprep.subr.mxu0 0.0
    %146 = vmatpush2.msra.mxu0 0.0
    %147 = vmatprep.subr.mxu0 0.0
    %148 = vmatpush2.msra.mxu0 0.0
    %149 = vmatprep.subr.mxu0 0.0
    %150 = vmatpush2.msra.mxu0 0.0
    %151 = vmatprep.subr.mxu0 0.0
    %152 = vmatpush2.msra.mxu0 0.0
    %153 = vmatprep.subr.mxu0 0.0
    %154 = vmatpush2.msra.mxu0 0.0
    %155 = vmatprep.subr.mxu0 0.0
    %156 = vmatpush2.msra.mxu0 0.0
    %157 = vmatprep.subr.mxu0 0.0
    %158 = vmatpush2.msra.mxu0 0.0
    %159 = vmatprep.mubr.f32.mxu0 0.0
    %160 = vmatmul.mubr.f32.gmra.mxu0 %v70
    %v161 = vpop.f32.mrf.mxu0
    %v162 = vadd.f32 %v93, %v161
    %v163 = vpop.f32.mrf.mxu0
    %164 = vmatprep.mubr.f32.mxu0 0.0
    %165 = vmatmul.mubr.f32.gmra.mxu0 %v71
    %v166 = vpop.f32.mrf.mxu0
    %v167 = vadd.f32 %v93, %v166
    %v168 = vpop.f32.mrf.mxu0
    %169 = vdwg.mxu0
    %170 = vst [vmem:[#allocation7] sm:$0xff] %v162
    %171 = vst [vmem:[#allocation7 + $0x8] sm:$0xff] %v167
    // Predicated region
    $region22: #{tpu_custom_call.1} parent=1 // pred_check
      _
    $region23: #{tpu_custom_call.1} parent=1 // pred_check_branch
      %173 = sbr.rel (0) target = $region25
    $region24: #{tpu_custom_call.1} parent=1 // pred_region
      %s175 = ssub.s32 256, 256
      %176 = vsyncadd [#allocation4], %s175
      %s177 = sshll.u32 [#allocation7], 4
      %s178 = int_to_ptr.vmem [resolvable:$true] %s177
      %183 = dma.vmem_to_hbm [thread:$0]  %s178, 256, %s3, [#allocation4], 128, 128, 8
    $region25: #{tpu_custom_call.1} parent=1 // pred_fallthru
      _
    // Predicated region
    $region26: #{tpu_custom_call.1} parent=1 // pred_check
      _
    $region27: #{tpu_custom_call.1} parent=1 // pred_check_branch
      %185 = sbr.rel (0) target = $region29
    $region28: #{tpu_custom_call.1} parent=1 // pred_region
      %186 = dma.done [#allocation4], 256
    $region29: #{tpu_custom_call.1} parent=1 // pred_fallthru
      _
    %187 = vsyncpa [#allocation3], 1
    %188 = vsyncpa [#allocation6], 1
    %189 = vsyncpa [#allocation4], 1

</llo_original>
